<compile_context>
chip_gen: v5e
topology: v5e:2x2
jax: 0.10.0
libtpu: 0.0.40
codegen_flags: <defaults>
</compile_context>

<pallas_src>
import functools
import math

import jax
import jax.numpy as jnp
from jax.experimental import pallas as pl
from jax.experimental.pallas import tpu as pltpu


def _round_up(x, m):
    return ((x + m - 1) // m) * m


def _hw_vmem_budget_bytes(frac=0.8, fallback=64 * 2**20):
    """Per-core VMEM budget with headroom; generation-aware (64 MiB v7x, 128 MiB v5e/v6e)."""
    cap = None
    try:
        info = pltpu.get_tpu_info()
        for attr in ("vmem_capacity_bytes", "vmem_bytes", "vmem_size_bytes"):
            cap = getattr(info, attr, None)
            if cap:
                break
    except Exception:
        cap = None
    if not cap:
        cap = fallback  # conservative: fits every generation
    return int(cap * frac)


def _resident_kernel(x_ref, w_ref, b_ref, o_ref, *, norm):
    # x_ref: (TB, K_pad) f32; w_ref: (K_pad, OUT_pad) bf16 (constant index -> resident);
    # b_ref: (1, OUT_pad) f32; o_ref: (TB, OUT_pad) f32.
    x = x_ref[...].astype(w_ref.dtype)                 # cast in VMEM, hides under MXU
    y = jnp.dot(x, w_ref[...], preferred_element_type=jnp.float32)
    y = y + b_ref[...]
    if norm:
        # F.normalize(y, p=2, dim=1): y / max(||y||, 1e-12) == y * rsqrt(max(||y||^2, 1e-24))
        sq = jnp.sum(y * y, axis=1, keepdims=True)
        y = y * jax.lax.rsqrt(jnp.maximum(sq, 1e-24))
    o_ref[...] = y


def _ktiled_kernel(x_ref, w_ref, b_ref, o_ref, *, norm):
    # x_ref: (TB, TK) f32; w_ref: (TK, OUT_pad) bf16; b_ref: (1, OUT_pad) f32;
    # o_ref: (TB, OUT_pad) f32, resident across the K axis -> doubles as the accumulator.
    k = pl.program_id(1)

    @pl.when(k == 0)
    def _():
        o_ref[...] = jnp.zeros_like(o_ref)

    x = x_ref[...].astype(w_ref.dtype)
    o_ref[...] += jnp.dot(x, w_ref[...], preferred_element_type=jnp.float32)

    @pl.when(k == pl.num_programs(1) - 1)
    def _():
        y = o_ref[...] + b_ref[...]
        if norm:
            sq = jnp.sum(y * y, axis=1, keepdims=True)
            y = y * jax.lax.rsqrt(jnp.maximum(sq, 1e-24))
        o_ref[...] = y


def prepare_img_encoder_params(weight, bias, compute_dtype=jnp.bfloat16):
    """One-time param prep (keep the result cached outside the call path):
    weight [out, in] -> [in, out] in the MXU dtype; bias -> f32."""
    w_t = jnp.asarray(weight).T.astype(compute_dtype)
    b = jnp.asarray(bias).astype(jnp.float32)
    return w_t, b


def img_encoder_forward(x, w_t, bias, norm=True, *,
                        tb_max=256, tk_max=1024, vmem_budget=None):
    """x: [B, in_size] f32; w_t: [in_size, out_size] (prepared); bias: [out_size] f32."""
    B, K = x.shape
    Kw, OUT = w_t.shape
    assert Kw == K and bias.shape == (OUT,)

    csz = jnp.dtype(w_t.dtype).itemsize   # weight / MXU dtype bytes
    xsz = jnp.dtype(x.dtype).itemsize     # activations stay in their HBM dtype (f32)
    osz = 4                               # f32 output (also the accumulator)

    OUT_pad = _round_up(OUT, 128)
    K128 = _round_up(K, 128)

    hw_budget = _hw_vmem_budget_bytes()
    budget = hw_budget if vmem_budget is None else int(vmem_budget)
    vmem_limit = hw_budget                # compiler limit stays generation-aware

    b2 = bias.astype(jnp.float32)
    if OUT_pad != OUT:
        b2 = jnp.pad(b2, (0, OUT_pad - OUT))
    b2 = b2.reshape(1, OUT_pad)

    # ---- path selection: keep the whole weight resident in VMEM whenever it fits ----
    # (conservatively count 2 buffers per block even for constant-index blocks)
    w_resident_bytes = 2 * K128 * OUT_pad * csz + 2 * OUT_pad * 4
    per_row_bytes = 2 * K128 * xsz + 2 * OUT_pad * osz  # x block + output block, per batch row
    resident = (w_resident_bytes + 8 * per_row_bytes) <= budget

    if resident:
        K_pad = K128
        TB = min(tb_max, _round_up(B, 8),
                 max(8, ((budget - w_resident_bytes) // per_row_bytes) // 8 * 8))
        B_pad = _round_up(B, TB)

        xc = x
        if B_pad != B or K_pad != K:
            xc = jnp.pad(xc, ((0, B_pad - B), (0, K_pad - K)))
        wc = w_t
        if K_pad != K or OUT_pad != OUT:
            wc = jnp.pad(wc, ((0, K_pad - K), (0, OUT_pad - OUT)))

        grid = (B_pad // TB,)
        cost = pl.CostEstimate(
            flops=2 * B_pad * K_pad * OUT_pad,
            transcendentals=B_pad if norm else 0,
            bytes_accessed=(B_pad * K_pad * xsz + K_pad * OUT_pad * csz
                            + OUT_pad * 4 + B_pad * OUT_pad * osz))

        out = pl.pallas_call(
            functools.partial(_resident_kernel, norm=norm),
            out_shape=jax.ShapeDtypeStruct((B_pad, OUT_pad), jnp.float32),
            grid=grid,
            in_specs=[
                pl.BlockSpec((TB, K_pad), lambda b: (b, 0)),        # x tile (f32, cast in-kernel)
                pl.BlockSpec((K_pad, OUT_pad), lambda b: (0, 0)),   # weight: fetched once, resident
                pl.BlockSpec((1, OUT_pad), lambda b: (0, 0)),       # bias row
            ],
            out_specs=pl.BlockSpec((TB, OUT_pad), lambda b: (b, 0)),
            compiler_params=pltpu.CompilerParams(
                dimension_semantics=("parallel",),
                vmem_limit_bytes=vmem_limit),
            cost_estimate=cost,
        )(xc, wc, b2)
    else:
        # K-tiled fallback: weight too large to keep resident in VMEM.
        TK = min(_round_up(tk_max, 128), K128)

        def fits(tb, tk):
            return (2 * tb * tk * xsz + 2 * tk * OUT_pad * csz
                    + 2 * OUT_pad * 4 + 2 * tb * OUT_pad * osz) <= budget

        while TK > 128 and not fits(8, TK):
            TK = max(128, _round_up(TK // 2, 128))
        TB = min(tb_max, _round_up(B, 8))
        while TB > 8 and not fits(TB, TK):
            TB = max(8, _round_up(TB // 2, 8))

        K_pad = _round_up(K, TK)
        B_pad = _round_up(B, TB)

        xc = x
        if B_pad != B or K_pad != K:
            xc = jnp.pad(xc, ((0, B_pad - B), (0, K_pad - K)))
        wc = w_t
        if K_pad != K or OUT_pad != OUT:
            wc = jnp.pad(wc, ((0, K_pad - K), (0, OUT_pad - OUT)))

        grid = (B_pad // TB, K_pad // TK)
        cost = pl.CostEstimate(
            flops=2 * B_pad * K_pad * OUT_pad,
            transcendentals=B_pad if norm else 0,
            bytes_accessed=(B_pad * K_pad * xsz
                            + grid[0] * K_pad * OUT_pad * csz   # weight re-streamed per batch tile
                            + OUT_pad * 4 + B_pad * OUT_pad * osz))

        out = pl.pallas_call(
            functools.partial(_ktiled_kernel, norm=norm),
            out_shape=jax.ShapeDtypeStruct((B_pad, OUT_pad), jnp.float32),
            grid=grid,
            in_specs=[
                pl.BlockSpec((TB, TK), lambda b, k: (b, k)),         # x tile
                pl.BlockSpec((TK, OUT_pad), lambda b, k: (k, 0)),    # weight tile ([in, out] layout)
                pl.BlockSpec((1, OUT_pad), lambda b, k: (0, 0)),     # bias row
            ],
            out_specs=pl.BlockSpec((TB, OUT_pad), lambda b, k: (b, 0)),
            compiler_params=pltpu.CompilerParams(
                dimension_semantics=("parallel", "arbitrary"),
                vmem_limit_bytes=vmem_limit),
            cost_estimate=cost,
        )(xc, wc, b2)

    return out[:B, :OUT]


def init_params(key, in_size, out_size):
    # xavier_uniform for weight (as in the module), PyTorch default uniform for bias.
    kw, kb = jax.random.split(key)
    bound_w = math.sqrt(6.0 / (in_size + out_size))
    weight = jax.random.uniform(kw, (out_size, in_size), jnp.float32,
                                minval=-bound_w, maxval=bound_w)
    bound_b = 1.0 / math.sqrt(in_size)
    bias = jax.random.uniform(kb, (out_size,), jnp.float32,
                              minval=-bound_b, maxval=bound_b)
    return weight, bias


def _reference(x, weight, bias, norm):
    # Same numerics as the kernel: bf16 MXU inputs, f32 accumulation, f32 epilogue.
    y = jnp.dot(x.astype(jnp.bfloat16), weight.astype(jnp.bfloat16).T,
                preferred_element_type=jnp.float32) + bias
    if norm:
        y = y / jnp.maximum(jnp.linalg.norm(y, axis=1, keepdims=True), 1e-12)
    return y


if __name__ == "__main__":
    key = jax.random.PRNGKey(0)
    k1, k2, k3, k4 = jax.random.split(key, 4)

    # Case 1: aligned shapes -> weight-resident path.
    B, IN, OUT = 32, 512, 256
    x = jax.random.normal(k1, (B, IN), jnp.float32)
    w, b = init_params(k2, IN, OUT)
    wt, bfp = prepare_img_encoder_params(w, b)

    out_norm = jax.block_until_ready(img_encoder_forward(x, wt, bfp, norm=True))
    out_lin = jax.block_until_ready(img_encoder_forward(x, wt, bfp, norm=False))
    assert out_norm.shape == (B, OUT)
    assert jnp.allclose(out_lin, _reference(x, w, b, False), atol=1e-3, rtol=1e-3), \
        "linear mismatch"
    assert jnp.allclose(out_norm, _reference(x, w, b, True), atol=1e-4, rtol=1e-4), \
        "normalize mismatch"

    # Case 2: odd, unaligned shapes -> exercises batch / K / OUT zero-padding paths.
    B2, IN2, OUT2 = 10, 200, 96
    x2 = jax.random.normal(k3, (B2, IN2), jnp.float32)
    w2, b2_ = init_params(k4, IN2, OUT2)
    wt2, bfp2 = prepare_img_encoder_params(w2, b2_)
    out2 = jax.block_until_ready(img_encoder_forward(x2, wt2, bfp2, norm=True))
    assert out2.shape == (B2, OUT2)
    assert jnp.allclose(out2, _reference(x2, w2, b2_, True), atol=1e-4, rtol=1e-4), \
        "padded-shape mismatch"

    # Case 3: force the K-tiled fallback (tiny tile budget) on case-1 data.
    out_kt = jax.block_until_ready(
        img_encoder_forward(x, wt, bfp, norm=True, vmem_budget=400 * 1024))
    assert jnp.allclose(out_kt, _reference(x, w, b, True), atol=1e-4, rtol=1e-4), \
        "k-tiled fallback mismatch"

    print("KERNEL_OK")
</pallas_src>

<mosaic_0001>
module attributes {stable_mosaic.version = 11 : i64} {
  func.func @_resident_kernel(%arg0: i32, %arg1: memref<32x512xf32, #tpu.memory_space<vmem>>, %arg2: memref<512x256xbf16, #tpu.memory_space<vmem>>, %arg3: memref<1x256xf32, #tpu.memory_space<vmem>>, %arg4: memref<32x256xf32, #tpu.memory_space<vmem>>) attributes {dimension_semantics = [#tpu.dimension_semantics<parallel>], iteration_bounds = array<i64: 1>, scalar_prefetch = 0 : i64, scratch_operands = 0 : i64, tpu.core_type = #tpu.core_type<tc>, window_params = [{transform_indices = @transform_0, window_bounds = array<i64: 32, 512>}, {pipeline_mode = #tpu.pipeline_mode<synchronous>, transform_indices = @transform_1, window_bounds = array<i64: 512, 256>}, {pipeline_mode = #tpu.pipeline_mode<synchronous>, transform_indices = @transform_2, window_bounds = array<i64: 1, 256>}, {transform_indices = @transform_3, window_bounds = array<i64: 32, 256>}]} {
    %c0 = arith.constant 0 : index
    %c0_0 = arith.constant 0 : index
    %0 = vector.load %arg1[%c0, %c0_0] : memref<32x512xf32, #tpu.memory_space<vmem>>, vector<32x512xf32>
    %1 = arith.truncf %0 : vector<32x512xf32> to vector<32x512xbf16>
    %c0_1 = arith.constant 0 : index
    %c0_2 = arith.constant 0 : index
    %2 = vector.load %arg2[%c0_1, %c0_2] : memref<512x256xbf16, #tpu.memory_space<vmem>>, vector<512x256xbf16>
    %cst = arith.constant dense<0.000000e+00> : vector<32x256xf32>
    %3 = tpu.matmul %1, %2, %cst {dimension_numbers = #tpu.dot_dimension_numbers<[1], [0], [0], [1], [0, 0, 1, 1], [], []>} : vector<32x512xbf16>, vector<512x256xbf16>, vector<32x256xf32> -> vector<32x256xf32>
    %c0_3 = arith.constant 0 : index
    %c0_4 = arith.constant 0 : index
    %4 = vector.load %arg3[%c0_3, %c0_4] : memref<1x256xf32, #tpu.memory_space<vmem>>, vector<1x256xf32>
    %5 = vector.broadcast %4 : vector<1x256xf32> to vector<32x256xf32>
    %6 = arith.addf %3, %5 : vector<32x256xf32>
    %7 = arith.mulf %6, %6 : vector<32x256xf32>
    %cst_5 = arith.constant dense<0.000000e+00> : vector<32xf32>
    %8 = vector.multi_reduction <add>, %7, %cst_5 [1] : vector<32x256xf32> to vector<32xf32>
    %9 = vector.shape_cast %8 : vector<32xf32> to vector<32x1xf32>
    %cst_6 = arith.constant 1.000000e-24 : f32
    %10 = vector.broadcast %cst_6 : f32 to vector<32x1xf32>
    %11 = arith.maximumf %9, %10 : vector<32x1xf32>
    %12 = math.rsqrt %11 : vector<32x1xf32>
    %13 = vector.broadcast %12 : vector<32x1xf32> to vector<32x256xf32>
    %14 = arith.mulf %6, %13 : vector<32x256xf32>
    %c0_7 = arith.constant 0 : index
    %c0_8 = arith.constant 0 : index
    %15 = vector.load %arg4[%c0_7, %c0_8] : memref<32x256xf32, #tpu.memory_space<vmem>>, vector<32x256xf32>
    tpu.vector_store %arg4[%c0_7, %c0_8], %14 {strides = array<i32>} : memref<32x256xf32, #tpu.memory_space<vmem>>, vector<32x256xf32>,
    return
  }
  func.func @transform_0(%arg0: i32) -> (i32, i32) {
    %c0_i32 = arith.constant 0 : i32
    %c0_i32_0 = arith.constant 0 : i32
    return %arg0, %c0_i32 : i32, i32
  }
  func.func @transform_1(%arg0: i32) -> (i32, i32) {
    %c0_i32 = arith.constant 0 : i32
    %c0_i32_0 = arith.constant 0 : i32
    %c0_i32_1 = arith.constant 0 : i32
    return %c0_i32, %c0_i32_0 : i32, i32
  }
  func.func @transform_2(%arg0: i32) -> (i32, i32) {
    %c0_i32 = arith.constant 0 : i32
    %c0_i32_0 = arith.constant 0 : i32
    %c0_i32_1 = arith.constant 0 : i32
    return %c0_i32, %c0_i32_0 : i32, i32
  }
  func.func @transform_3(%arg0: i32) -> (i32, i32) {
    %c0_i32 = arith.constant 0 : i32
    %c0_i32_0 = arith.constant 0 : i32
    return %arg0, %c0_i32 : i32, i32
  }
}

</mosaic_0001>

<llo_original>
// kernel: tpu_custom_call.1
$region0: #{tpu_custom_call.1}
  #allocation0 [shape = 'u32[]', space=smem, size = 0x4, offset = 0x4, fixed_abs, tag = 'smem constant byte address 0x4 - core index']
  #allocation1 [shape = 'u32[72,128]{1,0:T(1,128)}', space=vmem, size = 0x9000, scoped, tag = 'internal scratch']
  %s0 = inlined_call_operand.hbm [shape: f32[32,512], index: 0, kind: input, shape index: {}]
  %s1 = inlined_call_operand.hbm [shape: bf16[512,256], index: 1, kind: input, shape index: {}]
  %s2 = inlined_call_operand.hbm [shape: f32[1,256], index: 2, kind: input, shape index: {}]
  %s3 = inlined_call_operand.hbm [shape: f32[32,256], index: 3, kind: output, shape index: {}]
  %s4 = sld [smem:[#allocation0]]
  $region34: #{tpu_custom_call.1} parent=0
    _
  %s6 = ssub.s32 1, %s4
  %s7 = scalar_select 0, %s6, %s4
  $region1: #{tpu_custom_call.1} parent=0
    #allocation2 [shape = 'u8[65536]{0}', space=vmem, size = 0x10000, scoped, tag = 'input window, operand 0, single buffered']
    #allocation3 [shape = 's32[1]{0}', space=sflag, size = 0x4, scoped, tag = 'scoped memory for tpu_custom_call.1']
    #allocation4 [shape = 's32[1]{0}', space=sflag, size = 0x4, scoped, tag = 'scoped memory for tpu_custom_call.1']
    #allocation5 [shape = 'u8[262144]{0}', space=vmem, size = 0x40000, scoped, tag = 'input window, operand 1, single buffered']
    #allocation6 [shape = 's32[1]{0}', space=sflag, size = 0x4, scoped, tag = 'scoped memory for tpu_custom_call.1']
    #allocation7 [shape = 'u8[1024]{0}', space=vmem, size = 0x400, scoped, tag = 'input window, operand 2, single buffered']
    #allocation8 [shape = 'u8[32768]{0}', space=vmem, size = 0x8000, scoped, tag = 'output window, operand 0, single buffered']
    %8 = vsyncpa [#allocation3], 0
    %9 = vsyncpa [#allocation6], 0
    %10 = vsyncpa [#allocation4], 0
    // Predicated region
    $region2: #{tpu_custom_call.1} parent=1 // pred_check
      _
    $region3: #{tpu_custom_call.1} parent=1 // pred_check_branch
      %12 = sbr.rel (0) target = $region5
    $region4: #{tpu_custom_call.1} parent=1 // pred_region
      %14 = vsyncadd [#allocation3], 0
      %s15 = sshll.u32 %s0, 4
      %s16 = int_to_ptr.hbm [resolvable:$true] %s15
      %s17 = sshll.u32 [#allocation2], 4
      %s18 = int_to_ptr.vmem [resolvable:$true] %s17
      %23 = dma.hbm_to_vmem [thread:$0]  %s16, 2048, %s18, [#allocation3], 512, 512, 32
    $region5: #{tpu_custom_call.1} parent=1 // pred_fallthru
      _
    // Predicated region
    $region6: #{tpu_custom_call.1} parent=1 // pred_check
      _
    $region7: #{tpu_custom_call.1} parent=1 // pred_check_branch
      %25 = sbr.rel (0) target = $region9
    $region8: #{tpu_custom_call.1} parent=1 // pred_region
      %27 = vsyncadd [#allocation6], 0
      %s28 = sshll.u32 %s1, 4
      %s29 = int_to_ptr.hbm [resolvable:$true] %s28
      %s30 = sshll.u32 [#allocation5], 4
      %s31 = int_to_ptr.vmem [resolvable:$true] %s30
      %36 = dma.hbm_to_vmem [thread:$0]  %s29, 8192, %s31, [#allocation6], 128, 128, 8
    $region9: #{tpu_custom_call.1} parent=1 // pred_fallthru
      _
    // Predicated region
    $region10: #{tpu_custom_call.1} parent=1 // pred_check
      _
    $region11: #{tpu_custom_call.1} parent=1 // pred_check_branch
      %38 = sbr.rel (0) target = $region13
    $region12: #{tpu_custom_call.1} parent=1 // pred_region
      %40 = vsyncadd [#allocation6], 0
      %s42 = sshll.u32 %s2, 4
      %s43 = int_to_ptr.hbm [resolvable:$true] %s42
      %s44 = sshll.u32 [#allocation7], 4
      %s45 = int_to_ptr.vmem [resolvable:$true] %s44
      %47 = dma.hbm_to_vmem [thread:$0]  %s43, 32, %s45, [#allocation6]
    $region13: #{tpu_custom_call.1} parent=1 // pred_fallthru
      _
    // Predicated region
    $region14: #{tpu_custom_call.1} parent=1 // pred_check
      _
    $region15: #{tpu_custom_call.1} parent=1 // pred_check_branch
      %49 = sbr.rel (0) target = $region17
    $region16: #{tpu_custom_call.1} parent=1 // pred_region
      %51 = dma.done [#allocation3], 2048
    $region17: #{tpu_custom_call.1} parent=1 // pred_fallthru
      _
    // Predicated region
    $region18: #{tpu_custom_call.1} parent=1 // pred_check
      _
    $region19: #{tpu_custom_call.1} parent=1 // pred_check_branch
      %53 = sbr.rel (0) target = $region21
    $region20: #{tpu_custom_call.1} parent=1 // pred_region
      %55 = dma.done [#allocation6], 8192
    $region21: #{tpu_custom_call.1} parent=1 // pred_fallthru
      _
    // Predicated region
    $region22: #{tpu_custom_call.1} parent=1 // pred_check
      _
    $region23: #{tpu_custom_call.1} parent=1 // pred_check_branch
      %57 = sbr.rel (0) target = $region25
    $region24: #{tpu_custom_call.1} parent=1 // pred_region
      %59 = dma.done [#allocation6], 32
    $region25: #{tpu_custom_call.1} parent=1 // pred_fallthru
      _
    %v60 = vld [vmem:[#allocation2] sm:$0xff]
    %v61 = vld [vmem:[#allocation2 + $0x8] sm:$0xff]
    %v62 = vld [vmem:[#allocation2 + $0x10] sm:$0xff]
    %v63 = vld [vmem:[#allocation2 + $0x18] sm:$0xff]
    %v64 = vld [vmem:[#allocation2 + $0x20] sm:$0xff]
    %v65 = vld [vmem:[#allocation2 + $0x28] sm:$0xff]
    %v66 = vld [vmem:[#allocation2 + $0x30] sm:$0xff]
    %v67 = vld [vmem:[#allocation2 + $0x38] sm:$0xff]
    %v68 = vld [vmem:[#allocation2 + $0x40] sm:$0xff]
    %v69 = vld [vmem:[#allocation2 + $0x48] sm:$0xff]
    %v70 = vld [vmem:[#allocation2 + $0x50] sm:$0xff]
    %v71 = vld [vmem:[#allocation2 + $0x58] sm:$0xff]
    %v72 = vld [vmem:[#allocation2 + $0x60] sm:$0xff]
    %v73 = vld [vmem:[#allocation2 + $0x68] sm:$0xff]
    %v74 = vld [vmem:[#allocation2 + $0x70] sm:$0xff]
    %v75 = vld [vmem:[#allocation2 + $0x78] sm:$0xff]
    %v76 = vpack.c.bf16 %v64, %v60
    %v77 = vpack.c.bf16 %v65, %v61
    %v78 = vpack.c.bf16 %v66, %v62
    %v79 = vpack.c.bf16 %v67, %v63
    %v80 = vpack.c.bf16 %v72, %v68
    %v81 = vpack.c.bf16 %v73, %v69
    %v82 = vpack.c.bf16 %v74, %v70
    %v83 = vpack.c.bf16 %v75, %v71
    %v84 = vld [vmem:[#allocation5] sm:$0xff]
    %v85 = vld [vmem:[#allocation5 + $0x8] sm:$0xff]
    %v86 = vld [vmem:[#allocation5 + $0x10] sm:$0xff]
    %v87 = vld [vmem:[#allocation5 + $0x18] sm:$0xff]
    %v88 = vld [vmem:[#allocation5 + $0x20] sm:$0xff]
    %v89 = vld [vmem:[#allocation5 + $0x28] sm:$0xff]
    %v90 = vld [vmem:[#allocation5 + $0x30] sm:$0xff]
    %v91 = vld [vmem:[#allocation5 + $0x38] sm:$0xff]
    %v92 = vld [vmem:[#allocation5 + $0x40] sm:$0xff]
    %v93 = vld [vmem:[#allocation5 + $0x48] sm:$0xff]
    %v94 = vld [vmem:[#allocation5 + $0x50] sm:$0xff]
    %v95 = vld [vmem:[#allocation5 + $0x58] sm:$0xff]
    %v96 = vld [vmem:[#allocation5 + $0x60] sm:$0xff]
    %v97 = vld [vmem:[#allocation5 + $0x68] sm:$0xff]
    %v98 = vld [vmem:[#allocation5 + $0x70] sm:$0xff]
    %v99 = vld [vmem:[#allocation5 + $0x78] sm:$0xff]
    %v100 = vld [vmem:[#allocation5 + $0x80] sm:$0xff]
    %v101 = vld [vmem:[#allocation5 + $0x88] sm:$0xff]
    %v102 = vld [vmem:[#allocation5 + $0x90] sm:$0xff]
    %v103 = vld [vmem:[#allocation5 + $0x98] sm:$0xff]
    %v104 = vld [vmem:[#allocation5 + $0xa0] sm:$0xff]
    %v105 = vld [vmem:[#allocation5 + $0xa8] sm:$0xff]
    %v106 = vld [vmem:[#allocation5 + $0xb0] sm:$0xff]
    %v107 = vld [vmem:[#allocation5 + $0xb8] sm:$0xff]
    %v108 = vld [vmem:[#allocation5 + $0xc0] sm:$0xff]
    %v109 = vld [vmem:[#allocation5 + $0xc8] sm:$0xff]
    %v110 = vld [vmem:[#allocation5 + $0xd0] sm:$0xff]
    %v111 = vld [vmem:[#allocation5 + $0xd8] sm:$0xff]
    %v112 = vld [vmem:[#allocation5 + $0xe0] sm:$0xff]
    %v113 = vld [vmem:[#allocation5 + $0xe8] sm:$0xff]
    %v114 = vld [vmem:[#allocation5 + $0xf0] sm:$0xff]
    %v115 = vld [vmem:[#allocation5 + $0xf8] sm:$0xff]
    %v116 = vld [vmem:[#allocation5 + $0x100] sm:$0xff]
    %v117 = vld [vmem:[#allocation5 + $0x108] sm:$0xff]
    %v118 = vld [vmem:[#allocation5 + $0x110] sm:$0xff]
    %v119 = vld [vmem:[#allocation5 + $0x118] sm:$0xff]
    %v120 = vld [vmem:[#allocation5 + $0x120] sm:$0xff]
    %v121 = vld [vmem:[#allocation5 + $0x128] sm:$0xff]
    %v122 = vld [vmem:[#allocation5 + $0x130] sm:$0xff]
    %v123 = vld [vmem:[#allocation5 + $0x138] sm:$0xff]
    %v124 = vld [vmem:[#allocation5 + $0x140] sm:$0xff]
    %v125 = vld [vmem:[#allocation5 + $0x148] sm:$0xff]
    %v126 = vld [vmem:[#allocation5 + $0x150] sm:$0xff]
    %v127 = vld [vmem:[#allocation5 + $0x158] sm:$0xff]
    %v128 = vld [vmem:[#allocation5 + $0x160] sm:$0xff]
    %v129 = vld [vmem:[#allocation5 + $0x168] sm:$0xff]
    %v130 = vld [vmem:[#allocation5 + $0x170] sm:$0xff]
    %v131 = vld [vmem:[#allocation5 + $0x178] sm:$0xff]
    %v132 = vld [vmem:[#allocation5 + $0x180] sm:$0xff]
    %v133 = vld [vmem:[#allocation5 + $0x188] sm:$0xff]
    %v134 = vld [vmem:[#allocation5 + $0x190] sm:$0xff]
    %v135 = vld [vmem:[#allocation5 + $0x198] sm:$0xff]
    %v136 = vld [vmem:[#allocation5 + $0x1a0] sm:$0xff]
    %v137 = vld [vmem:[#allocation5 + $0x1a8] sm:$0xff]
    %v138 = vld [vmem:[#allocation5 + $0x1b0] sm:$0xff]
    %v139 = vld [vmem:[#allocation5 + $0x1b8] sm:$0xff]
    %v140 = vld [vmem:[#allocation5 + $0x1c0] sm:$0xff]
    %v141 = vld [vmem:[#allocation5 + $0x1c8] sm:$0xff]
    %v142 = vld [vmem:[#allocation5 + $0x1d0] sm:$0xff]
    %v143 = vld [vmem:[#allocation5 + $0x1d8] sm:$0xff]
    %v144 = vld [vmem:[#allocation5 + $0x1e0] sm:$0xff]
    %v145 = vld [vmem:[#allocation5 + $0x1e8] sm:$0xff]
    %v146 = vld [vmem:[#allocation5 + $0x1f0] sm:$0xff]
    %v147 = vld [vmem:[#allocation5 + $0x1f8] sm:$0xff]
    %v148 = vld [vmem:[#allocation7] sm:$0x3]
    %v150 = vperm.slane %v148, 0
    %v151 = vperm.slane %v148, 1
    %v218 = vunpack.c.l.b16 %v84
    %v219 = vunpack.c.h.b16 %v84
    %v220 = vunpack.c.l.b16 %v85
    %v221 = vunpack.c.h.b16 %v85
    %v222 = vunpack.c.l.b16 %v86
    %v223 = vunpack.c.h.b16 %v86
    %v224 = vunpack.c.l.b16 %v87
    %v225 = vunpack.c.h.b16 %v87
    %v226 = vunpack.c.l.b16 %v88
    %v227 = vunpack.c.h.b16 %v88
    %v228 = vunpack.c.l.b16 %v89
    %v229 = vunpack.c.h.b16 %v89
    %v230 = vunpack.c.l.b16 %v90
    %v231 = vunpack.c.h.b16 %v90
    %v232 = vunpack.c.l.b16 %v91
    %v233 = vunpack.c.h.b16 %v91
    %v234 = vunpack.c.l.b16 %v92
    %v235 = vunpack.c.h.b16 %v92
    %v236 = vunpack.c.l.b16 %v93
    %v237 = vunpack.c.h.b16 %v93
    %v238 = vunpack.c.l.b16 %v94
    %v239 = vunpack.c.h.b16 %v94
    %v240 = vunpack.c.l.b16 %v95
    %v241 = vunpack.c.h.b16 %v95
    %v242 = vunpack.c.l.b16 %v96
    %v243 = vunpack.c.h.b16 %v96
    %v244 = vunpack.c.l.b16 %v97
    %v245 = vunpack.c.h.b16 %v97
    %v246 = vunpack.c.l.b16 %v98
    %v247 = vunpack.c.h.b16 %v98
    %v248 = vunpack.c.l.b16 %v99
    %v249 = vunpack.c.h.b16 %v99
    %v250 = vunpack.c.l.b16 %v100
    %v251 = vunpack.c.h.b16 %v100
    %v252 = vunpack.c.l.b16 %v101
    %v253 = vunpack.c.h.b16 %v101
    %v254 = vunpack.c.l.b16 %v102
    %v255 = vunpack.c.h.b16 %v102
    %v256 = vunpack.c.l.b16 %v103
    %v257 = vunpack.c.h.b16 %v103
    %v258 = vunpack.c.l.b16 %v104
    %v259 = vunpack.c.h.b16 %v104
    %v260 = vunpack.c.l.b16 %v105
    %v261 = vunpack.c.h.b16 %v105
    %v262 = vunpack.c.l.b16 %v106
    %v263 = vunpack.c.h.b16 %v106
    %v264 = vunpack.c.l.b16 %v107
    %v265 = vunpack.c.h.b16 %v107
    %v266 = vunpack.c.l.b16 %v108
    %v267 = vunpack.c.h.b16 %v108
    %v268 = vunpack.c.l.b16 %v109
    %v269 = vunpack.c.h.b16 %v109
    %v270 = vunpack.c.l.b16 %v110
    %v271 = vunpack.c.h.b16 %v110
    %v272 = vunpack.c.l.b16 %v111
    %v273 = vunpack.c.h.b16 %v111
    %v274 = vunpack.c.l.b16 %v112
    %v275 = vunpack.c.h.b16 %v112
    %v276 = vunpack.c.l.b16 %v113
    %v277 = vunpack.c.h.b16 %v113
    %v278 = vunpack.c.l.b16 %v114
    %v279 = vunpack.c.h.b16 %v114
    %v280 = vunpack.c.l.b16 %v115
    %v281 = vunpack.c.h.b16 %v115
    %v282 = vunpack.c.l.b16 %v116
    %v283 = vunpack.c.h.b16 %v116
    %v284 = vunpack.c.l.b16 %v117
    %v285 = vunpack.c.h.b16 %v117
    %v286 = vunpack.c.l.b16 %v118
    %v287 = vunpack.c.h.b16 %v118
    %v288 = vunpack.c.l.b16 %v119
    %v289 = vunpack.c.h.b16 %v119
    %v290 = vunpack.c.l.b16 %v120
    %v291 = vunpack.c.h.b16 %v120
    %v292 = vunpack.c.l.b16 %v121
    %v293 = vunpack.c.h.b16 %v121
    %v294 = vunpack.c.l.b16 %v122
    %v295 = vunpack.c.h.b16 %v122
    %v296 = vunpack.c.l.b16 %v123
    %v297 = vunpack.c.h.b16 %v123
    %v298 = vunpack.c.l.b16 %v124
    %v299 = vunpack.c.h.b16 %v124
    %v300 = vunpack.c.l.b16 %v125
    %v301 = vunpack.c.h.b16 %v125
    %v302 = vunpack.c.l.b16 %v126
    %v303 = vunpack.c.h.b16 %v126
    %v304 = vunpack.c.l.b16 %v127
    %v305 = vunpack.c.h.b16 %v127
    %v306 = vunpack.c.l.b16 %v128
    %v307 = vunpack.c.h.b16 %v128
    %v308 = vunpack.c.l.b16 %v129
    %v309 = vunpack.c.h.b16 %v129
    %v310 = vunpack.c.l.b16 %v130
    %v311 = vunpack.c.h.b16 %v130
    %v312 = vunpack.c.l.b16 %v131
    %v313 = vunpack.c.h.b16 %v131
    %v314 = vunpack.c.l.b16 %v132
    %v315 = vunpack.c.h.b16 %v132
    %v316 = vunpack.c.l.b16 %v133
    %v317 = vunpack.c.h.b16 %v133
    %v318 = vunpack.c.l.b16 %v134
    %v319 = vunpack.c.h.b16 %v134
    %v320 = vunpack.c.l.b16 %v135
    %v321 = vunpack.c.h.b16 %v135
    %v322 = vunpack.c.l.b16 %v136
    %v323 = vunpack.c.h.b16 %v136
    %v324 = vunpack.c.l.b16 %v137
    %v325 = vunpack.c.h.b16 %v137
    %v326 = vunpack.c.l.b16 %v138
    %v327 = vunpack.c.h.b16 %v138
    %v328 = vunpack.c.l.b16 %v139
    %v329 = vunpack.c.h.b16 %v139
    %v330 = vunpack.c.l.b16 %v140
    %v331 = vunpack.c.h.b16 %v140
    %v332 = vunpack.c.l.b16 %v141
    %v333 = vunpack.c.h.b16 %v141
    %v334 = vunpack.c.l.b16 %v142
    %v335 = vunpack.c.h.b16 %v142
    %v336 = vunpack.c.l.b16 %v143
    %v337 = vunpack.c.h.b16 %v143
    %v338 = vunpack.c.l.b16 %v144
    %v339 = vunpack.c.h.b16 %v144
    %v340 = vunpack.c.l.b16 %v145
    %v341 = vunpack.c.h.b16 %v145
    %v342 = vunpack.c.l.b16 %v146
    %v343 = vunpack.c.h.b16 %v146
    %v344 = vunpack.c.l.b16 %v147
    %v345 = vunpack.c.h.b16 %v147
    %v346 = vpack.c.b16 %v220, %v218
    %v347 = vpack.c.b16 %v221, %v219
    %v348 = vpack.c.b16 %v224, %v222
    %v349 = vpack.c.b16 %v225, %v223
    %v350 = vpack.c.b16 %v228, %v226
    %v351 = vpack.c.b16 %v229, %v227
    %v352 = vpack.c.b16 %v232, %v230
    %v353 = vpack.c.b16 %v233, %v231
    %v354 = vpack.c.b16 %v236, %v234
    %v355 = vpack.c.b16 %v237, %v235
    %v356 = vpack.c.b16 %v240, %v238
    %v357 = vpack.c.b16 %v241, %v239
    %v358 = vpack.c.b16 %v244, %v242
    %v359 = vpack.c.b16 %v245, %v243
    %v360 = vpack.c.b16 %v248, %v246
    %v361 = vpack.c.b16 %v249, %v247
    %v362 = vpack.c.b16 %v252, %v250
    %v363 = vpack.c.b16 %v253, %v251
    %v364 = vpack.c.b16 %v256, %v254
    %v365 = vpack.c.b16 %v257, %v255
    %v366 = vpack.c.b16 %v260, %v258
    %v367 = vpack.c.b16 %v261, %v259
    %v368 = vpack.c.b16 %v264, %v262
    %v369 = vpack.c.b16 %v265, %v263
    %v370 = vpack.c.b16 %v268, %v266
    %v371 = vpack.c.b16 %v269, %v267
    %v372 = vpack.c.b16 %v272, %v270
    %v373 = vpack.c.b16 %v273, %v271
    %v374 = vpack.c.b16 %v276, %v274
    %v375 = vpack.c.b16 %v277, %v275
    %v376 = vpack.c.b16 %v280, %v278
    %v377 = vpack.c.b16 %v281, %v279
    %v378 = vpack.c.b16 %v284, %v282
    %v379 = vpack.c.b16 %v285, %v283
    %v380 = vpack.c.b16 %v288, %v286
    %v381 = vpack.c.b16 %v289, %v287
    %v382 = vpack.c.b16 %v292, %v290
    %v383 = vpack.c.b16 %v293, %v291
    %v384 = vpack.c.b16 %v296, %v294
    %v385 = vpack.c.b16 %v297, %v295
    %v386 = vpack.c.b16 %v300, %v298
    %v387 = vpack.c.b16 %v301, %v299
    %v388 = vpack.c.b16 %v304, %v302
    %v389 = vpack.c.b16 %v305, %v303
    %v390 = vpack.c.b16 %v308, %v306
    %v391 = vpack.c.b16 %v309, %v307
    %v392 = vpack.c.b16 %v312, %v310
    %v393 = vpack.c.b16 %v313, %v311
    %v394 = vpack.c.b16 %v316, %v314
    %v395 = vpack.c.b16 %v317, %v315
    %v396 = vpack.c.b16 %v320, %v318
    %v397 = vpack.c.b16 %v321, %v319
    %v398 = vpack.c.b16 %v324, %v322
    %v399 = vpack.c.b16 %v325, %v323
    %v400 = vpack.c.b16 %v328, %v326
    %v401 = vpack.c.b16 %v329, %v327
    %v402 = vpack.c.b16 %v332, %v330
    %v403 = vpack.c.b16 %v333, %v331
    %v404 = vpack.c.b16 %v336, %v334
    %v405 = vpack.c.b16 %v337, %v335
    %v406 = vpack.c.b16 %v340, %v338
    %v407 = vpack.c.b16 %v341, %v339
    %v408 = vpack.c.b16 %v344, %v342
    %v409 = vpack.c.b16 %v345, %v343
    %474 = vmatpush.bf16.msra.mxu0 %v360
    %475 = vmatpush.bf16.msra.mxu0 %v358
    %476 = vmatpush.bf16.msra.mxu0 %v356
    %477 = vmatpush.bf16.msra.mxu0 %v354
    %478 = vmatpush.bf16.msra.mxu0 %v352
    %479 = vmatpush.bf16.msra.mxu0 %v350
    %480 = vmatpush.bf16.msra.mxu0 %v348
    %481 = vmatpush.bf16.msra.mxu0 %v346
    %482 = vmatmul.bf16.gmra.mxu0 %v76
    %v483 = vpop.f32.mrf.mxu0
    %v484 = vadd.f32 %v150, %v483
    %v485 = vpop.f32.mrf.mxu0
    %v486 = vadd.f32 %v150, %v485
    %487 = vmatmul.bf16.gmra.mxu0 %v80
    %v488 = vpop.f32.mrf.mxu0
    %v489 = vadd.f32 %v150, %v488
    %v490 = vpop.f32.mrf.mxu0
    %v491 = vadd.f32 %v150, %v490
    %492 = vdwg.mxu0
    %493 = vmatpush.bf16.msra.mxu0 %v376
    %494 = vmatpush.bf16.msra.mxu0 %v374
    %495 = vmatpush.bf16.msra.mxu0 %v372
    %496 = vmatpush.bf16.msra.mxu0 %v370
    %497 = vmatpush.bf16.msra.mxu0 %v368
    %498 = vmatpush.bf16.msra.mxu0 %v366
    %499 = vmatpush.bf16.msra.mxu0 %v364
    %500 = vmatpush.bf16.msra.mxu0 %v362
    %501 = vmatmul.bf16.gmra.mxu0 %v77
    %v502 = vpop.f32.mrf.mxu0
    %v503 = vadd.f32 %v484, %v502
    %v504 = vpop.f32.mrf.mxu0
    %v505 = vadd.f32 %v486, %v504
    %506 = vmatmul.bf16.gmra.mxu0 %v81
    %v507 = vpop.f32.mrf.mxu0
    %v508 = vadd.f32 %v489, %v507
    %v509 = vpop.f32.mrf.mxu0
    %v510 = vadd.f32 %v491, %v509
    %511 = vdwg.mxu0
    %512 = vmatpush.bf16.msra.mxu0 %v392
    %513 = vmatpush.bf16.msra.mxu0 %v390
    %514 = vmatpush.bf16.msra.mxu0 %v388
    %515 = vmatpush.bf16.msra.mxu0 %v386
    %516 = vmatpush.bf16.msra.mxu0 %v384
    %517 = vmatpush.bf16.msra.mxu0 %v382
    %518 = vmatpush.bf16.msra.mxu0 %v380
    %519 = vmatpush.bf16.msra.mxu0 %v378
    %520 = vmatmul.bf16.gmra.mxu0 %v78
    %v521 = vpop.f32.mrf.mxu0
    %v522 = vadd.f32 %v503, %v521
    %v523 = vpop.f32.mrf.mxu0
    %v524 = vadd.f32 %v505, %v523
    %525 = vmatmul.bf16.gmra.mxu0 %v82
    %v526 = vpop.f32.mrf.mxu0
    %v527 = vadd.f32 %v508, %v526
    %v528 = vpop.f32.mrf.mxu0
    %v529 = vadd.f32 %v510, %v528
    %530 = vdwg.mxu0
    %531 = vmatpush.bf16.msra.mxu0 %v408
    %532 = vmatpush.bf16.msra.mxu0 %v406
    %533 = vmatpush.bf16.msra.mxu0 %v404
    %534 = vmatpush.bf16.msra.mxu0 %v402
    %535 = vmatpush.bf16.msra.mxu0 %v400
    %536 = vmatpush.bf16.msra.mxu0 %v398
    %537 = vmatpush.bf16.msra.mxu0 %v396
    %538 = vmatpush.bf16.msra.mxu0 %v394
    %539 = vmatmul.bf16.gmra.mxu0 %v79
    %v540 = vpop.f32.mrf.mxu0
    %v541 = vadd.f32 %v522, %v540
    %v542 = vpop.f32.mrf.mxu0
    %v543 = vadd.f32 %v524, %v542
    %544 = vmatmul.bf16.gmra.mxu0 %v83
    %v545 = vpop.f32.mrf.mxu0
    %v546 = vadd.f32 %v527, %v545
    %v547 = vpop.f32.mrf.mxu0
    %v548 = vadd.f32 %v529, %v547
    %549 = vdwg.mxu0
    %550 = vmatpush.bf16.msra.mxu0 %v361
    %551 = vmatpush.bf16.msra.mxu0 %v359
    %552 = vmatpush.bf16.msra.mxu0 %v357
    %553 = vmatpush.bf16.msra.mxu0 %v355
    %554 = vmatpush.bf16.msra.mxu0 %v353
    %555 = vmatpush.bf16.msra.mxu0 %v351
    %556 = vmatpush.bf16.msra.mxu0 %v349
    %557 = vmatpush.bf16.msra.mxu0 %v347
    %558 = vmatmul.bf16.gmra.mxu0 %v76
    %v559 = vpop.f32.mrf.mxu0
    %v560 = vadd.f32 %v151, %v559
    %v561 = vpop.f32.mrf.mxu0
    %v562 = vadd.f32 %v151, %v561
    %563 = vmatmul.bf16.gmra.mxu0 %v80
    %v564 = vpop.f32.mrf.mxu0
    %v565 = vadd.f32 %v151, %v564
    %v566 = vpop.f32.mrf.mxu0
    %v567 = vadd.f32 %v151, %v566
    %568 = vdwg.mxu0
    %569 = vmatpush.bf16.msra.mxu0 %v377
    %570 = vmatpush.bf16.msra.mxu0 %v375
    %571 = vmatpush.bf16.msra.mxu0 %v373
    %572 = vmatpush.bf16.msra.mxu0 %v371
    %573 = vmatpush.bf16.msra.mxu0 %v369
    %574 = vmatpush.bf16.msra.mxu0 %v367
    %575 = vmatpush.bf16.msra.mxu0 %v365
    %576 = vmatpush.bf16.msra.mxu0 %v363
    %577 = vmatmul.bf16.gmra.mxu0 %v77
    %v578 = vpop.f32.mrf.mxu0
    %v579 = vadd.f32 %v560, %v578
    %v580 = vpop.f32.mrf.mxu0
    %v581 = vadd.f32 %v562, %v580
    %582 = vmatmul.bf16.gmra.mxu0 %v81
    %v583 = vpop.f32.mrf.mxu0
    %v584 = vadd.f32 %v565, %v583
    %v585 = vpop.f32.mrf.mxu0
    %v586 = vadd.f32 %v567, %v585
    %587 = vdwg.mxu0
    %588 = vmatpush.bf16.msra.mxu0 %v393
    %589 = vmatpush.bf16.msra.mxu0 %v391
    %590 = vmatpush.bf16.msra.mxu0 %v389
    %591 = vmatpush.bf16.msra.mxu0 %v387
    %592 = vmatpush.bf16.msra.mxu0 %v385
    %593 = vmatpush.bf16.msra.mxu0 %v383
    %594 = vmatpush.bf16.msra.mxu0 %v381
    %595 = vmatpush.bf16.msra.mxu0 %v379
    %596 = vmatmul.bf16.gmra.mxu0 %v78
    %v597 = vpop.f32.mrf.mxu0
    %v598 = vadd.f32 %v579, %v597
    %v599 = vpop.f32.mrf.mxu0
    %v600 = vadd.f32 %v581, %v599
    %601 = vmatmul.bf16.gmra.mxu0 %v82
    %v602 = vpop.f32.mrf.mxu0
    %v603 = vadd.f32 %v584, %v602
    %v604 = vpop.f32.mrf.mxu0
    %v605 = vadd.f32 %v586, %v604
    %606 = vdwg.mxu0
    %607 = vmatpush.bf16.msra.mxu0 %v409
    %608 = vmatpush.bf16.msra.mxu0 %v407
    %609 = vmatpush.bf16.msra.mxu0 %v405
    %610 = vmatpush.bf16.msra.mxu0 %v403
    %611 = vmatpush.bf16.msra.mxu0 %v401
    %612 = vmatpush.bf16.msra.mxu0 %v399
    %613 = vmatpush.bf16.msra.mxu0 %v397
    %614 = vmatpush.bf16.msra.mxu0 %v395
    %615 = vmatmul.bf16.gmra.mxu0 %v79
    %v616 = vpop.f32.mrf.mxu0
    %v617 = vadd.f32 %v598, %v616
    %v618 = vpop.f32.mrf.mxu0
    %v619 = vadd.f32 %v600, %v618
    %620 = vmatmul.bf16.gmra.mxu0 %v83
    %v621 = vpop.f32.mrf.mxu0
    %v622 = vadd.f32 %v603, %v621
    %v623 = vpop.f32.mrf.mxu0
    %v624 = vadd.f32 %v605, %v623
    %625 = vdwg.mxu0
    %v626 = vmul.f32 %v541, %v541
    %v627 = vmul.f32 %v617, %v617
    %v628 = vmul.f32 %v543, %v543
    %v629 = vmul.f32 %v619, %v619
    %v630 = vmul.f32 %v546, %v546
    %v631 = vmul.f32 %v622, %v622
    %v632 = vmul.f32 %v548, %v548
    %v633 = vmul.f32 %v624, %v624
    %v634 = vadd.f32 %v626, %v627
    %635 = vadd.xlane.f32.xlu0 %v634
    %v636 = vpop.xlane.xlu0 %635
    %v637 = vadd.f32 %v628, %v629
    %638 = vadd.xlane.f32.xlu0 %v637
    %v639 = vpop.xlane.xlu0 %638
    %v640 = vadd.f32 %v630, %v631
    %641 = vadd.xlane.f32.xlu0 %v640
    %v642 = vpop.xlane.xlu0 %641
    %v643 = vadd.f32 %v632, %v633
    %644 = vadd.xlane.f32.xlu0 %v643
    %v645 = vpop.xlane.xlu0 %644
    %v646 = vmax.f32 %v636, 1e-24
    %v647 = vmax.f32 %v639, 1e-24
    %v648 = vmax.f32 %v642, 1e-24
    %v649 = vmax.f32 %v645, 1e-24
    %v650 = vrsqrt.pop %v646
    %v651 = vmul.f32 %v650, %v646
    %v652 = vmul.f32 %v651, %v650
    %v653 = vmul.f32 0.5, %v652
    %v654 = vsub.f32 1.5, %v653
    %v655 = vmul.f32 %v650, %v654
    %vm656 = vweird.f32 %v646
    %vm657 = vweird.f32 %v650
    %vm658 = vmor %vm656, %vm657
    %v659 = vsel %vm658, %v650, %v655
    %v660 = vrsqrt.pop %v647
    %v661 = vmul.f32 %v660, %v647
    %v662 = vmul.f32 %v661, %v660
    %v663 = vmul.f32 0.5, %v662
    %v664 = vsub.f32 1.5, %v663
    %v665 = vmul.f32 %v660, %v664
    %vm666 = vweird.f32 %v647
    %vm667 = vweird.f32 %v660
    %vm668 = vmor %vm666, %vm667
    %v669 = vsel %vm668, %v660, %v665
    %v670 = vrsqrt.pop %v648
    %v671 = vmul.f32 %v670, %v648
    %v672 = vmul.f32 %v671, %v670
    %v673 = vmul.f32 0.5, %v672
    %v674 = vsub.f32 1.5, %v673
    %v675 = vmul.f32 %v670, %v674
    %vm676 = vweird.f32 %v648
    %vm677 = vweird.f32 %v670
    %vm678 = vmor %vm676, %vm677
    %v679 = vsel %vm678, %v670, %v675
    %v680 = vrsqrt.pop %v649
    %v681 = vmul.f32 %v680, %v649
    %v682 = vmul.f32 %v681, %v680
    %v683 = vmul.f32 0.5, %v682
    %v684 = vsub.f32 1.5, %v683
    %v685 = vmul.f32 %v680, %v684
    %vm686 = vweird.f32 %v649
    %vm687 = vweird.f32 %v680
    %vm688 = vmor %vm686, %vm687
    %v689 = vsel %vm688, %v680, %v685
    %v690 = vmul.f32 %v541, %v659
    %v691 = vmul.f32 %v617, %v659
    %v692 = vmul.f32 %v543, %v669
    %v693 = vmul.f32 %v619, %v669
    %v694 = vmul.f32 %v546, %v679
    %v695 = vmul.f32 %v622, %v679
    %v696 = vmul.f32 %v548, %v689
    %v697 = vmul.f32 %v624, %v689
    %698 = vst [vmem:[#allocation8] sm:$0xff] %v690
    %699 = vst [vmem:[#allocation8 + $0x8] sm:$0xff] %v691
    %700 = vst [vmem:[#allocation8 + $0x10] sm:$0xff] %v692
    %701 = vst [vmem:[#allocation8 + $0x18] sm:$0xff] %v693
    %702 = vst [vmem:[#allocation8 + $0x20] sm:$0xff] %v694
    %703 = vst [vmem:[#allocation8 + $0x28] sm:$0xff] %v695
    %704 = vst [vmem:[#allocation8 + $0x30] sm:$0xff] %v696
    %705 = vst [vmem:[#allocation8 + $0x38] sm:$0xff] %v697
    // Predicated region
    $region26: #{tpu_custom_call.1} parent=1 // pred_check
      _
    $region27: #{tpu_custom_call.1} parent=1 // pred_check_branch
      %707 = sbr.rel (0) target = $region29
    $region28: #{tpu_custom_call.1} parent=1 // pred_region
      %709 = vsyncadd [#allocation4], 0
      %s710 = sshll.u32 [#allocation8], 4
      %s711 = int_to_ptr.vmem [resolvable:$true] %s710
      %s712 = sshll.u32 %s3, 4
      %s713 = int_to_ptr.hbm [resolvable:$true] %s712
      %718 = dma.vmem_to_hbm [thread:$0]  %s711, 1024, %s713, [#allocation4], 256, 256, 16
    $region29: #{tpu_custom_call.1} parent=1 // pred_fallthru
      _
    // Predicated region
    $region30: #{tpu_custom_call.1} parent=1 // pred_check
      _
    $region31: #{tpu_custom_call.1} parent=1 // pred_check_branch
      %720 = sbr.rel (0) target = $region33
    $region32: #{tpu_custom_call.1} parent=1 // pred_region
      %722 = dma.done [#allocation4], 1024
    $region33: #{tpu_custom_call.1} parent=1 // pred_fallthru
      _
    %723 = vsyncpa [#allocation3], 1
    %724 = vsyncpa [#allocation6], 1
    %725 = vsyncpa [#allocation4], 1

</llo_original>
